<compile_context>
chip_gen: v7x
topology: tpu7x:2x2x1
jax: 0.10.0
libtpu: 0.0.40
codegen_flags: <defaults>
</compile_context>

<pallas_src>
import jax
import jax.numpy as jnp
import numpy as np
from jax import lax
from jax.experimental import pallas as pl
from jax.experimental.pallas import tpu as pltpu


def gat_kernel(x_ref, xblk_ref, ii_col_ref, jj_col_ref, rr_col_ref, ii_row_ref,
               w3_ref, wlin_ref, b_ref, out_ref):
    f32 = jnp.float32
    NEG = f32(-1e30)

    N, H = x_ref.shape                 # nodes, hidden
    M = xblk_ref.shape[0]              # 2N + R
    E = ii_col_ref.shape[0]            # edges

    x = x_ref[...]                     # [N, H]
    xblk = xblk_ref[...]               # [2N+R, 3H] block-diag: x | x | rel_emb
    ii_col = ii_col_ref[...]           # [E, 1] destination node per edge
    jj_col = jj_col_ref[...]           # [E, 1] source node per edge
    rr_col = rr_col_ref[...]           # [E, 1] relation id per edge
    ii_row = ii_row_ref[...]           # [1, E] destination node, lane-major

    # One-hot matrices, all built from iota compares (VPU only, no transposes).
    #   G[e, ii[e]] = G[e, N+jj[e]] = G[e, 2N+rr[e]] = 1   (combined gather)
    #   P = G[:, :N] equivalent (dest one-hot), PT = P^T (scatter), built directly.
    lane_m = lax.broadcasted_iota(jnp.int32, (E, M), 1)
    lane_n = lax.broadcasted_iota(jnp.int32, (E, N), 1)
    sub_n = lax.broadcasted_iota(jnp.int32, (N, E), 0)

    mask_p = lane_n == ii_col                                        # [E, N] bool
    P = mask_p.astype(f32)                                           # [E, N]
    G = ((lane_m == ii_col)
         | (lane_m == (jj_col + N))
         | (lane_m == (rr_col + 2 * N))).astype(f32)                 # [E, 2N+R]
    PT = (sub_n == ii_row).astype(f32)                               # [N, E]

    # ---- Attention logits: s = [s_head; s_tail; s_rel] via block-diag Xblk,
    #      gathered+summed to edges in one dot.
    s = jnp.dot(xblk, w3_ref[...], preferred_element_type=f32)       # [2N+R, 1]
    att = jnp.dot(G, s, preferred_element_type=f32)                  # [E, 1]

    # ---- Segment softmax numerator (denominator applied per node after scatter).
    masked = jnp.where(mask_p, att, NEG)                             # [E, N]
    m_node = jnp.max(masked, axis=0, keepdims=True)                  # [1, N]
    m_edge = lax.dot_general(P, m_node, (((1,), (1,)), ((), ())),
                             preferred_element_type=f32)             # [E, 1]
    p = jnp.exp(att - m_edge)                                        # [E, 1]
    denom_node = jnp.dot(PT, p, preferred_element_type=f32)          # [N, 1]

    # ---- Fused edge-feature gather, weighting, and scatter-sum.
    e_cat = jnp.dot(G, xblk, preferred_element_type=f32)             # [E, 3H]
    acc = jnp.dot(PT, p * e_cat, preferred_element_type=f32)         # [N, 3H]
    e_feat = jnp.maximum(acc / (denom_node + f32(1e-16)), f32(0.0))  # [N, 3H]

    # ---- Final Linear, single K=4H=128 contraction; lane-dense [N, OUT_PAD] store.
    h = jnp.concatenate([x, e_feat], axis=1)                         # [N, 4H]
    out_ref[...] = (jnp.dot(h, wlin_ref[...], preferred_element_type=f32)
                    + b_ref[...])


def t_wise_graphattention(x, edge_index_all, rel_all, rel_emb,
                          ww_weight, lin_weight, lin_bias):
    """x: [N, H], edge_index_all: [2, E], rel_all: [E], rel_emb: [R, H].
    ww_weight: [1, 3H] (torch layout), lin_weight: [OUT, 4H], lin_bias: [OUT]."""
    N, H = x.shape
    R = rel_emb.shape[0]
    E = edge_index_all.shape[1]
    OUT = lin_bias.shape[0]
    OUT_PAD = ((OUT + 127) // 128) * 128          # lane-dense output (384 for 300)
    pad = OUT_PAD - OUT

    xf = x.astype(jnp.float32)
    rel_f = rel_emb.astype(jnp.float32)

    ii = edge_index_all[0].astype(jnp.int32)
    jj = edge_index_all[1].astype(jnp.int32)
    rr = rel_all.astype(jnp.int32)
    # Column form broadcasts along the edge (sublane) axis for G / mask_p; the row
    # form feeds the direct PT construction. All reshapes are free.
    ii_col = ii.reshape(E, 1)
    jj_col = jj.reshape(E, 1)
    rr_col = rr.reshape(E, 1)
    ii_row = ii.reshape(1, E)

    # Block-diagonal feature operand: rows 0..N-1 -> x in cols [0,H),
    # rows N..2N-1 -> x in cols [H,2H), rows 2N.. -> rel_emb in cols [2H,3H).
    # (~6*N*H extra bytes — fine while N stays small; see gridding TODO.)
    Xblk = jnp.zeros((2 * N + R, 3 * H), jnp.float32)
    Xblk = Xblk.at[:N, :H].set(xf)
    Xblk = Xblk.at[N:2 * N, H:2 * H].set(xf)
    Xblk = Xblk.at[2 * N:, 2 * H:].set(rel_f)

    # Stacked attention projection [w_head; w_tail; w_rel] as a single [3H, 1] column.
    w3 = ww_weight.astype(jnp.float32).T                              # [3H, 1]

    # Full final Linear weight [4H, OUT_PAD] (zero-padded lanes) + bias row.
    wlin = jnp.pad(lin_weight.T.astype(jnp.float32), ((0, 0), (0, pad)))  # [4H, OUT_PAD]
    blin = jnp.pad(lin_bias.astype(jnp.float32), (0, pad)).reshape(1, OUT_PAD)

    vmem = pl.BlockSpec(memory_space=pltpu.MemorySpace.VMEM)
    out_pad = pl.pallas_call(
        gat_kernel,
        out_shape=jax.ShapeDtypeStruct((N, OUT_PAD), jnp.float32),
        in_specs=[vmem] * 9,
        out_specs=vmem,
    )(xf, Xblk, ii_col, jj_col, rr_col, ii_row, w3, wlin, blin)
    return out_pad[:, :OUT]


def reference(x, edge_index_all, rel_all, rel_emb, ww_weight, lin_weight, lin_bias):
    N = x.shape[0]
    ei, ej = edge_index_all[0], edge_index_all[1]
    e_head = x[ei]
    e_tail = x[ej]
    e_rel = rel_emb[rel_all]
    tri = jnp.concatenate([e_head, e_tail, e_rel], axis=1)
    att = (tri @ ww_weight.T)[:, 0]
    m = jax.ops.segment_max(att, ei, num_segments=N)
    p = jnp.exp(att - m[ei])
    denom = jax.ops.segment_sum(p, ei, num_segments=N)
    attn = p / (denom[ei] + 1e-16)
    x_e = jax.ops.segment_sum(tri * attn[:, None], ei, num_segments=N)
    e_feat = jax.nn.relu(x_e)
    return jnp.concatenate([x, e_feat], axis=1) @ lin_weight.T + lin_bias


if __name__ == "__main__":
    key = jax.random.PRNGKey(0)
    e_hidden = 32
    N, E, R = 16, 48, 8
    OUT = 300

    k = jax.random.split(key, 8)
    x = jax.random.normal(k[0], (N, e_hidden), dtype=jnp.float32)
    rel_emb = jax.random.normal(k[1], (R, e_hidden), dtype=jnp.float32)
    edge_index_all = jax.random.randint(k[2], (2, E), 0, N, dtype=jnp.int32)
    rel_all = jax.random.randint(k[3], (E,), 0, R, dtype=jnp.int32)

    ww_weight = jax.random.normal(k[4], (1, 3 * e_hidden), dtype=jnp.float32) * 0.1
    lin_weight = jax.random.normal(k[5], (OUT, 4 * e_hidden), dtype=jnp.float32) * 0.05
    lin_bias = jax.random.normal(k[6], (OUT,), dtype=jnp.float32) * 0.01

    out = t_wise_graphattention(x, edge_index_all, rel_all, rel_emb,
                                ww_weight, lin_weight, lin_bias)
    out = jax.block_until_ready(out)

    ref = jax.block_until_ready(
        reference(x, edge_index_all, rel_all, rel_emb, ww_weight, lin_weight, lin_bias))
    np.testing.assert_allclose(np.asarray(out), np.asarray(ref), rtol=1e-4, atol=1e-4)

    print("KERNEL_OK")
</pallas_src>

<mosaic_0001>
module attributes {stable_mosaic.version = 11 : i64} {
  func.func @gat_kernel(%arg0: memref<16x32xf32, #tpu.memory_space<vmem>>, %arg1: memref<40x96xf32, #tpu.memory_space<vmem>>, %arg2: memref<48x1xi32, #tpu.memory_space<vmem>>, %arg3: memref<48x1xi32, #tpu.memory_space<vmem>>, %arg4: memref<48x1xi32, #tpu.memory_space<vmem>>, %arg5: memref<1x48xi32, #tpu.memory_space<vmem>>, %arg6: memref<96x1xf32, #tpu.memory_space<vmem>>, %arg7: memref<128x384xf32, #tpu.memory_space<vmem>>, %arg8: memref<1x384xf32, #tpu.memory_space<vmem>>, %arg9: memref<16x384xf32, #tpu.memory_space<vmem>>) attributes {dimension_semantics = [], scalar_prefetch = 0 : i64, scratch_operands = 0 : i64, tpu.core_type = #tpu.core_type<tc>} {
    %c0 = arith.constant 0 : index
    %c0_0 = arith.constant 0 : index
    %0 = vector.load %arg0[%c0, %c0_0] : memref<16x32xf32, #tpu.memory_space<vmem>>, vector<16x32xf32>
    %c0_1 = arith.constant 0 : index
    %c0_2 = arith.constant 0 : index
    %1 = vector.load %arg1[%c0_1, %c0_2] : memref<40x96xf32, #tpu.memory_space<vmem>>, vector<40x96xf32>
    %c0_3 = arith.constant 0 : index
    %c0_4 = arith.constant 0 : index
    %2 = vector.load %arg2[%c0_3, %c0_4] : memref<48x1xi32, #tpu.memory_space<vmem>>, vector<48x1xi32>
    %c0_5 = arith.constant 0 : index
    %c0_6 = arith.constant 0 : index
    %3 = vector.load %arg3[%c0_5, %c0_6] : memref<48x1xi32, #tpu.memory_space<vmem>>, vector<48x1xi32>
    %c0_7 = arith.constant 0 : index
    %c0_8 = arith.constant 0 : index
    %4 = vector.load %arg4[%c0_7, %c0_8] : memref<48x1xi32, #tpu.memory_space<vmem>>, vector<48x1xi32>
    %c0_9 = arith.constant 0 : index
    %c0_10 = arith.constant 0 : index
    %5 = vector.load %arg5[%c0_9, %c0_10] : memref<1x48xi32, #tpu.memory_space<vmem>>, vector<1x48xi32>
    %6 = tpu.iota {dimensions = array<i32: 1>} : vector<48x40xi32>
    %7 = tpu.iota {dimensions = array<i32: 1>} : vector<48x16xi32>
    %8 = tpu.iota {dimensions = array<i32: 0>} : vector<16x48xi32>
    %9 = vector.broadcast %2 : vector<48x1xi32> to vector<48x16xi32>
    %10 = arith.cmpi eq, %7, %9 : vector<48x16xi32>
    %11 = arith.extui %10 : vector<48x16xi1> to vector<48x16xi32>
    %12 = arith.sitofp %11 : vector<48x16xi32> to vector<48x16xf32>
    %13 = vector.broadcast %2 : vector<48x1xi32> to vector<48x40xi32>
    %14 = arith.cmpi eq, %6, %13 : vector<48x40xi32>
    %c16_i32 = arith.constant 16 : i32
    %15 = vector.broadcast %c16_i32 : i32 to vector<48x1xi32>
    %16 = arith.addi %3, %15 : vector<48x1xi32>
    %17 = vector.broadcast %16 : vector<48x1xi32> to vector<48x40xi32>
    %18 = arith.cmpi eq, %6, %17 : vector<48x40xi32>
    %19 = arith.ori %14, %18 : vector<48x40xi1>
    %c32_i32 = arith.constant 32 : i32
    %20 = vector.broadcast %c32_i32 : i32 to vector<48x1xi32>
    %21 = arith.addi %4, %20 : vector<48x1xi32>
    %22 = vector.broadcast %21 : vector<48x1xi32> to vector<48x40xi32>
    %23 = arith.cmpi eq, %6, %22 : vector<48x40xi32>
    %24 = arith.ori %19, %23 : vector<48x40xi1>
    %25 = arith.extui %24 : vector<48x40xi1> to vector<48x40xi32>
    %26 = arith.sitofp %25 : vector<48x40xi32> to vector<48x40xf32>
    %27 = vector.broadcast %5 : vector<1x48xi32> to vector<16x48xi32>
    %28 = arith.cmpi eq, %8, %27 : vector<16x48xi32>
    %29 = arith.extui %28 : vector<16x48xi1> to vector<16x48xi32>
    %30 = arith.sitofp %29 : vector<16x48xi32> to vector<16x48xf32>
    %c0_11 = arith.constant 0 : index
    %c0_12 = arith.constant 0 : index
    %31 = vector.load %arg6[%c0_11, %c0_12] : memref<96x1xf32, #tpu.memory_space<vmem>>, vector<96x1xf32>
    %cst = arith.constant dense<0.000000e+00> : vector<40x1xf32>
    %32 = tpu.matmul %1, %31, %cst {dimension_numbers = #tpu.dot_dimension_numbers<[1], [0], [0], [1], [0, 0, 1, 1], [], []>} : vector<40x96xf32>, vector<96x1xf32>, vector<40x1xf32> -> vector<40x1xf32>
    %cst_13 = arith.constant dense<0.000000e+00> : vector<48x1xf32>
    %33 = tpu.matmul %26, %32, %cst_13 {dimension_numbers = #tpu.dot_dimension_numbers<[1], [0], [0], [1], [0, 0, 1, 1], [], []>} : vector<48x40xf32>, vector<40x1xf32>, vector<48x1xf32> -> vector<48x1xf32>
    %cst_14 = arith.constant -1.000000e+30 : f32
    %34 = vector.shape_cast %33 : vector<48x1xf32> to vector<48x1xf32>
    %35 = vector.broadcast %34 : vector<48x1xf32> to vector<48x16xf32>
    %36 = vector.broadcast %cst_14 : f32 to vector<48x16xf32>
    %37 = arith.select %10, %35, %36 : vector<48x16xi1>, vector<48x16xf32>
    %cst_15 = arith.constant dense<0xFF800000> : vector<16xf32>
    %38 = vector.multi_reduction <maximumf>, %37, %cst_15 [0] : vector<48x16xf32> to vector<16xf32>
    %39 = vector.shape_cast %38 : vector<16xf32> to vector<1x16xf32>
    %cst_16 = arith.constant dense<0.000000e+00> : vector<48x1xf32>
    %40 = tpu.matmul %12, %39, %cst_16 {dimension_numbers = #tpu.dot_dimension_numbers<[1], [1], [0], [0], [0, 0, 1, 0], [], []>} : vector<48x16xf32>, vector<1x16xf32>, vector<48x1xf32> -> vector<48x1xf32>
    %41 = arith.subf %33, %40 : vector<48x1xf32>
    %42 = math.exp %41 : vector<48x1xf32>
    %cst_17 = arith.constant dense<0.000000e+00> : vector<16x1xf32>
    %43 = tpu.matmul %30, %42, %cst_17 {dimension_numbers = #tpu.dot_dimension_numbers<[1], [0], [0], [1], [0, 0, 1, 1], [], []>} : vector<16x48xf32>, vector<48x1xf32>, vector<16x1xf32> -> vector<16x1xf32>
    %cst_18 = arith.constant dense<0.000000e+00> : vector<48x96xf32>
    %44 = tpu.matmul %26, %1, %cst_18 {dimension_numbers = #tpu.dot_dimension_numbers<[1], [0], [0], [1], [0, 0, 1, 1], [], []>} : vector<48x40xf32>, vector<40x96xf32>, vector<48x96xf32> -> vector<48x96xf32>
    %45 = vector.broadcast %42 : vector<48x1xf32> to vector<48x96xf32>
    %46 = arith.mulf %45, %44 : vector<48x96xf32>
    %cst_19 = arith.constant dense<0.000000e+00> : vector<16x96xf32>
    %47 = tpu.matmul %30, %46, %cst_19 {dimension_numbers = #tpu.dot_dimension_numbers<[1], [0], [0], [1], [0, 0, 1, 1], [], []>} : vector<16x48xf32>, vector<48x96xf32>, vector<16x96xf32> -> vector<16x96xf32>
    %cst_20 = arith.constant 1.000000e-16 : f32
    %48 = vector.broadcast %cst_20 : f32 to vector<16x1xf32>
    %49 = arith.addf %43, %48 : vector<16x1xf32>
    %50 = vector.broadcast %49 : vector<16x1xf32> to vector<16x96xf32>
    %51 = arith.divf %47, %50 : vector<16x96xf32>
    %cst_21 = arith.constant 0.000000e+00 : f32
    %52 = vector.broadcast %cst_21 : f32 to vector<16x96xf32>
    %53 = arith.maximumf %51, %52 : vector<16x96xf32>
    %54 = tpu.concatenate %0, %53 in 1 : vector<16x32xf32>, vector<16x96xf32> -> vector<16x128xf32>
    %c0_22 = arith.constant 0 : index
    %c0_23 = arith.constant 0 : index
    %55 = vector.load %arg7[%c0_22, %c0_23] : memref<128x384xf32, #tpu.memory_space<vmem>>, vector<128x384xf32>
    %cst_24 = arith.constant dense<0.000000e+00> : vector<16x384xf32>
    %56 = tpu.matmul %54, %55, %cst_24 {dimension_numbers = #tpu.dot_dimension_numbers<[1], [0], [0], [1], [0, 0, 1, 1], [], []>} : vector<16x128xf32>, vector<128x384xf32>, vector<16x384xf32> -> vector<16x384xf32>
    %c0_25 = arith.constant 0 : index
    %c0_26 = arith.constant 0 : index
    %57 = vector.load %arg8[%c0_25, %c0_26] : memref<1x384xf32, #tpu.memory_space<vmem>>, vector<1x384xf32>
    %58 = vector.broadcast %57 : vector<1x384xf32> to vector<16x384xf32>
    %59 = arith.addf %56, %58 : vector<16x384xf32>
    %c0_27 = arith.constant 0 : index
    %c0_28 = arith.constant 0 : index
    %60 = vector.load %arg9[%c0_27, %c0_28] : memref<16x384xf32, #tpu.memory_space<vmem>>, vector<16x384xf32>
    tpu.vector_store %arg9[%c0_27, %c0_28], %59 {strides = array<i32>} : memref<16x384xf32, #tpu.memory_space<vmem>>, vector<16x384xf32>,
    return
  }
}

</mosaic_0001>

<llo_original>
// kernel: tpu_custom_call.1
$region0: #{tpu_custom_call.1}
  #allocation0 [shape = 'u32[]', space=smem, size = 0x4, offset = 0x4, fixed_abs, tag = 'smem constant byte address 0x4 - core index']
  #allocation1 [shape = 'u32[144,128]{1,0:T(1,128)}', space=vmem, size = 0x12000, scoped, tag = 'internal scratch']
  %s0 = inlined_call_operand.vmem [shape: f32[16,32], index: 0, kind: input, shape index: {}]
  %s1 = inlined_call_operand.vmem [shape: f32[40,96], index: 1, kind: input, shape index: {}]
  %s2 = inlined_call_operand.vmem [shape: s32[48,1], index: 2, kind: input, shape index: {}]
  %s3 = inlined_call_operand.vmem [shape: s32[48,1], index: 3, kind: input, shape index: {}]
  %s4 = inlined_call_operand.vmem [shape: s32[48,1], index: 4, kind: input, shape index: {}]
  %s5 = inlined_call_operand.vmem [shape: s32[1,48], index: 5, kind: input, shape index: {}]
  %s6 = inlined_call_operand.vmem [shape: f32[96,1], index: 6, kind: input, shape index: {}]
  %s7 = inlined_call_operand.hbm [shape: f32[128,384], index: 7, kind: input, shape index: {}]
  %s8 = inlined_call_operand.vmem [shape: f32[1,384], index: 8, kind: input, shape index: {}]
  %s9 = inlined_call_operand.hbm [shape: f32[16,384], index: 9, kind: output, shape index: {}]
  %s10 = sld [smem:[#allocation0]]
  $region50: #{tpu_custom_call.1} parent=0
    _
  %s12 = ssub.s32 1, %s10
  %s13 = scalar_select 0, %s12, %s10
  $region1: #{tpu_custom_call.1} parent=0
    #allocation2 [shape = 'u8[196608]{0}', space=vmem, size = 0x30000, scoped, tag = 'input window, operand 7, single buffered']
    #allocation3 [shape = 's32[1]{0}', space=sflag, size = 0x4, scoped, tag = 'scoped memory for tpu_custom_call.1']
    #allocation4 [shape = 's32[1]{0}', space=sflag, size = 0x4, scoped, tag = 'scoped memory for tpu_custom_call.1']
    #allocation5 [shape = 'u8[24576]{0}', space=vmem, size = 0x6000, scoped, tag = 'output window, operand 0, single buffered']
    %14 = vsyncpa [#allocation3], 0
    %15 = vsyncpa [#allocation4], 0
    // Predicated region
    $region2: #{tpu_custom_call.1} parent=1 // pred_check
      _
    $region3: #{tpu_custom_call.1} parent=1 // pred_check_branch
      %17 = sbr.rel (0) target = $region5
    $region4: #{tpu_custom_call.1} parent=1 // pred_region
      _
    $region5: #{tpu_custom_call.1} parent=1 // pred_fallthru
      _
    // Predicated region
    $region6: #{tpu_custom_call.1} parent=1 // pred_check
      _
    $region7: #{tpu_custom_call.1} parent=1 // pred_check_branch
      %19 = sbr.rel (0) target = $region9
    $region8: #{tpu_custom_call.1} parent=1 // pred_region
      _
    $region9: #{tpu_custom_call.1} parent=1 // pred_fallthru
      _
    // Predicated region
    $region10: #{tpu_custom_call.1} parent=1 // pred_check
      _
    $region11: #{tpu_custom_call.1} parent=1 // pred_check_branch
      %21 = sbr.rel (0) target = $region13
    $region12: #{tpu_custom_call.1} parent=1 // pred_region
      _
    $region13: #{tpu_custom_call.1} parent=1 // pred_fallthru
      _
    // Predicated region
    $region14: #{tpu_custom_call.1} parent=1 // pred_check
      _
    $region15: #{tpu_custom_call.1} parent=1 // pred_check_branch
      %23 = sbr.rel (0) target = $region17
    $region16: #{tpu_custom_call.1} parent=1 // pred_region
      _
    $region17: #{tpu_custom_call.1} parent=1 // pred_fallthru
      _
    // Predicated region
    $region18: #{tpu_custom_call.1} parent=1 // pred_check
      _
    $region19: #{tpu_custom_call.1} parent=1 // pred_check_branch
      %25 = sbr.rel (0) target = $region21
    $region20: #{tpu_custom_call.1} parent=1 // pred_region
      _
    $region21: #{tpu_custom_call.1} parent=1 // pred_fallthru
      _
    // Predicated region
    $region22: #{tpu_custom_call.1} parent=1 // pred_check
      _
    $region23: #{tpu_custom_call.1} parent=1 // pred_check_branch
      %27 = sbr.rel (0) target = $region25
    $region24: #{tpu_custom_call.1} parent=1 // pred_region
      _
    $region25: #{tpu_custom_call.1} parent=1 // pred_fallthru
      _
    // Predicated region
    $region26: #{tpu_custom_call.1} parent=1 // pred_check
      _
    $region27: #{tpu_custom_call.1} parent=1 // pred_check_branch
      %29 = sbr.rel (0) target = $region29
    $region28: #{tpu_custom_call.1} parent=1 // pred_region
      _
    $region29: #{tpu_custom_call.1} parent=1 // pred_fallthru
      _
    // Predicated region
    $region30: #{tpu_custom_call.1} parent=1 // pred_check
      _
    $region31: #{tpu_custom_call.1} parent=1 // pred_check_branch
      %31 = sbr.rel (0) target = $region33
    $region32: #{tpu_custom_call.1} parent=1 // pred_region
      %s33 = ssub.s32 6144, 6144
      %34 = vsyncadd [#allocation3], %s33
      %s35 = sshll.u32 [#allocation2], 4
      %s36 = int_to_ptr.vmem [resolvable:$true] %s35
      %41 = dma.hbm_to_vmem [thread:$0]  %s7, 6144, %s36, [#allocation3], 384, 384, 24
    $region33: #{tpu_custom_call.1} parent=1 // pred_fallthru
      _
    // Predicated region
    $region34: #{tpu_custom_call.1} parent=1 // pred_check
      _
    $region35: #{tpu_custom_call.1} parent=1 // pred_check_branch
      %43 = sbr.rel (0) target = $region37
    $region36: #{tpu_custom_call.1} parent=1 // pred_region
      _
    $region37: #{tpu_custom_call.1} parent=1 // pred_fallthru
      _
    // Predicated region
    $region38: #{tpu_custom_call.1} parent=1 // pred_check
      _
    $region39: #{tpu_custom_call.1} parent=1 // pred_check_branch
      %45 = sbr.rel (0) target = $region41
    $region40: #{tpu_custom_call.1} parent=1 // pred_region
      %46 = dma.done [#allocation3], 6144
    $region41: #{tpu_custom_call.1} parent=1 // pred_fallthru
      _
    %v47 = vld [vmem:[%s0] sm:$0xff]
    %v48 = vld [vmem:[%s0 + $0x8] sm:$0xff]
    %v49 = vld [vmem:[%s1] sm:$0xff]
    %v50 = vld [vmem:[%s1 + $0x8] sm:$0xff]
    %v51 = vld [vmem:[%s1 + $0x10] sm:$0xff]
    %v52 = vld [vmem:[%s1 + $0x18] sm:$0xff]
    %v53 = vld [vmem:[%s1 + $0x20] sm:$0xff]
    %v54 = vld [vmem:[%s2] sm:$0xff]
    %v55 = vld [vmem:[%s2 + $0x8] sm:$0xff]
    %v56 = vld [vmem:[%s2 + $0x10] sm:$0xff]
    %v57 = vld [vmem:[%s2 + $0x18] sm:$0xff]
    %v58 = vld [vmem:[%s2 + $0x20] sm:$0xff]
    %v59 = vld [vmem:[%s2 + $0x28] sm:$0xff]
    %v60 = vld [vmem:[%s3] sm:$0xff]
    %v61 = vld [vmem:[%s3 + $0x8] sm:$0xff]
    %v62 = vld [vmem:[%s3 + $0x10] sm:$0xff]
    %v63 = vld [vmem:[%s3 + $0x18] sm:$0xff]
    %v64 = vld [vmem:[%s3 + $0x20] sm:$0xff]
    %v65 = vld [vmem:[%s3 + $0x28] sm:$0xff]
    %v66 = vld [vmem:[%s4] sm:$0xff]
    %v67 = vld [vmem:[%s4 + $0x8] sm:$0xff]
    %v68 = vld [vmem:[%s4 + $0x10] sm:$0xff]
    %v69 = vld [vmem:[%s4 + $0x18] sm:$0xff]
    %v70 = vld [vmem:[%s4 + $0x20] sm:$0xff]
    %v71 = vld [vmem:[%s4 + $0x28] sm:$0xff]
    %v72 = vld [vmem:[%s5] sm:$0x1]
    %v73 = vlaneseq
    %v74 = vand.u32 %v73, 127
    %v75 = vlaneseq
    %v76 = vshrl.u32 %v75, 7
    %v77 = vadd.s32 %v76, 8
    %78 = vset.pattern.permute.xlu0 0
    %79 = vperm.xlu0 %78, %v54
    %v80 = vpop.permute.xlu0 %79
    %81 = vset.pattern.permute.xlu0 0
    %82 = vperm.xlu0 %81, %v55
    %v83 = vpop.permute.xlu0 %82
    %84 = vset.pattern.permute.xlu0 0
    %85 = vperm.xlu0 %84, %v56
    %v86 = vpop.permute.xlu0 %85
    %87 = vset.pattern.permute.xlu0 0
    %88 = vperm.xlu0 %87, %v57
    %v89 = vpop.permute.xlu0 %88
    %90 = vset.pattern.permute.xlu0 0
    %91 = vperm.xlu0 %90, %v58
    %v92 = vpop.permute.xlu0 %91
    %93 = vset.pattern.permute.xlu0 0
    %94 = vperm.xlu0 %93, %v59
    %v95 = vpop.permute.xlu0 %94
    %vm96 = vcmp.eq.s32.totalorder %v74, %v80
    %vm97 = vcmp.eq.s32.totalorder %v74, %v83
    %vm98 = vcmp.eq.s32.totalorder %v74, %v86
    %vm99 = vcmp.eq.s32.totalorder %v74, %v89
    %vm100 = vcmp.eq.s32.totalorder %v74, %v92
    %vm101 = vcmp.eq.s32.totalorder %v74, %v95
    %v102 = vsel %vm96, 1, 0
    %v103 = vsel %vm97, 1, 0
    %v104 = vsel %vm98, 1, 0
    %v105 = vsel %vm99, 1, 0
    %v106 = vsel %vm100, 1, 0
    %v107 = vsel %vm101, 1, 0
    %v108 = vcvt.s32.f32 %v102
    %v109 = vcvt.s32.f32 %v103
    %v110 = vcvt.s32.f32 %v104
    %v111 = vcvt.s32.f32 %v105
    %v112 = vcvt.s32.f32 %v106
    %v113 = vcvt.s32.f32 %v107
    %v114 = vadd.s32 %v60, 16
    %v115 = vadd.s32 %v61, 16
    %v116 = vadd.s32 %v62, 16
    %v117 = vadd.s32 %v63, 16
    %v118 = vadd.s32 %v64, 16
    %v119 = vadd.s32 %v65, 16
    %120 = vset.pattern.permute.xlu0 0
    %121 = vperm.xlu0 %120, %v114
    %v122 = vpop.permute.xlu0 %121
    %123 = vset.pattern.permute.xlu0 0
    %124 = vperm.xlu0 %123, %v115
    %v125 = vpop.permute.xlu0 %124
    %126 = vset.pattern.permute.xlu0 0
    %127 = vperm.xlu0 %126, %v116
    %v128 = vpop.permute.xlu0 %127
    %129 = vset.pattern.permute.xlu0 0
    %130 = vperm.xlu0 %129, %v117
    %v131 = vpop.permute.xlu0 %130
    %132 = vset.pattern.permute.xlu0 0
    %133 = vperm.xlu0 %132, %v118
    %v134 = vpop.permute.xlu0 %133
    %135 = vset.pattern.permute.xlu0 0
    %136 = vperm.xlu0 %135, %v119
    %v137 = vpop.permute.xlu0 %136
    %vm138 = vcmp.eq.s32.totalorder %v74, %v122
    %vm139 = vcmp.eq.s32.totalorder %v74, %v125
    %vm140 = vcmp.eq.s32.totalorder %v74, %v128
    %vm141 = vcmp.eq.s32.totalorder %v74, %v131
    %vm142 = vcmp.eq.s32.totalorder %v74, %v134
    %vm143 = vcmp.eq.s32.totalorder %v74, %v137
    %vm144 = vmor %vm96, %vm138
    %vm145 = vmor %vm97, %vm139
    %vm146 = vmor %vm98, %vm140
    %vm147 = vmor %vm99, %vm141
    %vm148 = vmor %vm100, %vm142
    %vm149 = vmor %vm101, %vm143
    %v150 = vadd.s32 %v66, 32
    %v151 = vadd.s32 %v67, 32
    %v152 = vadd.s32 %v68, 32
    %v153 = vadd.s32 %v69, 32
    %v154 = vadd.s32 %v70, 32
    %v155 = vadd.s32 %v71, 32
    %156 = vset.pattern.permute.xlu0 0
    %157 = vperm.xlu0 %156, %v150
    %v158 = vpop.permute.xlu0 %157
    %159 = vset.pattern.permute.xlu0 0
    %160 = vperm.xlu0 %159, %v151
    %v161 = vpop.permute.xlu0 %160
    %162 = vset.pattern.permute.xlu0 0
    %163 = vperm.xlu0 %162, %v152
    %v164 = vpop.permute.xlu0 %163
    %165 = vset.pattern.permute.xlu0 0
    %166 = vperm.xlu0 %165, %v153
    %v167 = vpop.permute.xlu0 %166
    %168 = vset.pattern.permute.xlu0 0
    %169 = vperm.xlu0 %168, %v154
    %v170 = vpop.permute.xlu0 %169
    %171 = vset.pattern.permute.xlu0 0
    %172 = vperm.xlu0 %171, %v155
    %v173 = vpop.permute.xlu0 %172
    %vm174 = vcmp.eq.s32.totalorder %v74, %v158
    %vm175 = vcmp.eq.s32.totalorder %v74, %v161
    %vm176 = vcmp.eq.s32.totalorder %v74, %v164
    %vm177 = vcmp.eq.s32.totalorder %v74, %v167
    %vm178 = vcmp.eq.s32.totalorder %v74, %v170
    %vm179 = vcmp.eq.s32.totalorder %v74, %v173
    %vm180 = vmor %vm144, %vm174
    %vm181 = vmor %vm145, %vm175
    %vm182 = vmor %vm146, %vm176
    %vm183 = vmor %vm147, %vm177
    %vm184 = vmor %vm148, %vm178
    %vm185 = vmor %vm149, %vm179
    %v186 = vsel %vm180, 1, 0
    %v187 = vsel %vm181, 1, 0
    %v188 = vsel %vm182, 1, 0
    %v189 = vsel %vm183, 1, 0
    %v190 = vsel %vm184, 1, 0
    %v191 = vsel %vm185, 1, 0
    %v192 = vcvt.s32.f32 %v186
    %v193 = vcvt.s32.f32 %v187
    %v194 = vcvt.s32.f32 %v188
    %v195 = vcvt.s32.f32 %v189
    %v196 = vcvt.s32.f32 %v190
    %v197 = vcvt.s32.f32 %v191
    %v198 = vlaneseq
    %v199 = vshrl.u32 %v198, 7
    %v200 = vsub.s32 0, %v199
    %v201 = vrot.slane %v72, %v200
    %vm202 = vcmp.eq.s32.totalorder %v76, %v201
    %vm203 = vcmp.eq.s32.totalorder %v77, %v201
    %v204 = vsel %vm202, 1, 0
    %v205 = vsel %vm203, 1, 0
    %v206 = vcvt.s32.f32 %v204
    %v207 = vcvt.s32.f32 %v205
    %v208 = vld [vmem:[%s6] sm:$0xff]
    %v209 = vld [vmem:[%s6 + $0x8] sm:$0xff]
    %v210 = vld [vmem:[%s6 + $0x10] sm:$0xff]
    %v211 = vld [vmem:[%s6 + $0x18] sm:$0xff]
    %v212 = vld [vmem:[%s6 + $0x20] sm:$0xff]
    %v213 = vld [vmem:[%s6 + $0x28] sm:$0xff]
    %v214 = vld [vmem:[%s6 + $0x30] sm:$0xff]
    %v215 = vld [vmem:[%s6 + $0x38] sm:$0xff]
    %v216 = vld [vmem:[%s6 + $0x40] sm:$0xff]
    %v217 = vld [vmem:[%s6 + $0x48] sm:$0xff]
    %v218 = vld [vmem:[%s6 + $0x50] sm:$0xff]
    %v219 = vld [vmem:[%s6 + $0x58] sm:$0xff]
    %vm220 = vcmask 785408
    %v222 = vsel %vm220, %v49, 0
    %v225 = vsel %vm220, %v50, 0
    %v228 = vsel %vm220, %v51, 0
    %v231 = vsel %vm220, %v52, 0
    %v234 = vsel %vm220, %v53, 0
    %236 = vmatprep.subr.mxu0 0.0
    %237 = vmatpush1.msra.mxu0 %v208
    %238 = vmatprep.subr.mxu0 0.0
    %239 = vmatpush1.msra.mxu0 %v209
    %240 = vmatprep.subr.mxu0 0.0
    %241 = vmatpush1.msra.mxu0 %v210
    %242 = vmatprep.subr.mxu0 0.0
    %243 = vmatpush1.msra.mxu0 %v211
    %244 = vmatprep.subr.mxu0 0.0
    %245 = vmatpush1.msra.mxu0 %v212
    %246 = vmatprep.subr.mxu0 0.0
    %247 = vmatpush1.msra.mxu0 %v213
    %248 = vmatprep.subr.mxu0 0.0
    %249 = vmatpush1.msra.mxu0 %v214
    %250 = vmatprep.subr.mxu0 0.0
    %251 = vmatpush1.msra.mxu0 %v215
    %252 = vmatprep.subr.mxu0 0.0
    %253 = vmatpush1.msra.mxu0 %v216
    %254 = vmatprep.subr.mxu0 0.0
    %255 = vmatpush1.msra.mxu0 %v217
    %256 = vmatprep.subr.mxu0 0.0
    %257 = vmatpush1.msra.mxu0 %v218
    %258 = vmatprep.subr.mxu0 0.0
    %259 = vmatpush1.msra.mxu0 %v219
    %260 = vmatprep.subr.mxu0 0.0
    %261 = vmatpush1.msra.mxu0 0.0
    %262 = vmatprep.subr.mxu0 0.0
    %263 = vmatpush1.msra.mxu0 0.0
    %264 = vmatprep.subr.mxu0 0.0
    %265 = vmatpush1.msra.mxu0 0.0
    %266 = vmatprep.subr.mxu0 0.0
    %267 = vmatpush1.msra.mxu0 0.0
    %268 = vmatprep.subr.mxu0 0.0
    %269 = vmatpush1.msra.mxu0 0.0
    %270 = vmatprep.subr.mxu0 0.0
    %271 = vmatpush1.msra.mxu0 0.0
    %272 = vmatprep.subr.mxu0 0.0
    %273 = vmatpush1.msra.mxu0 0.0
    %274 = vmatprep.subr.mxu0 0.0
    %275 = vmatpush1.msra.mxu0 0.0
    %276 = vmatprep.subr.mxu0 0.0
    %277 = vmatpush1.msra.mxu0 0.0
    %278 = vmatprep.subr.mxu0 0.0
    %279 = vmatpush1.msra.mxu0 0.0
    %280 = vmatprep.subr.mxu0 0.0
    %281 = vmatpush1.msra.mxu0 0.0
    %282 = vmatprep.subr.mxu0 0.0
    %283 = vmatpush1.msra.mxu0 0.0
    %284 = vmatprep.subr.mxu0 0.0
    %285 = vmatpush1.msra.mxu0 0.0
    %286 = vmatprep.subr.mxu0 0.0
    %287 = vmatpush1.msra.mxu0 0.0
    %288 = vmatprep.subr.mxu0 0.0
    %289 = vmatpush1.msra.mxu0 0.0
    %290 = vmatprep.subr.mxu0 0.0
    %291 = vmatpush1.msra.mxu0 0.0
    %292 = vmatprep.subr.mxu0 0.0
    %293 = vmatpush1.msra.mxu0 0.0
    %294 = vmatprep.subr.mxu0 0.0
    %295 = vmatpush1.msra.mxu0 0.0
    %296 = vmatprep.subr.mxu0 0.0
    %297 = vmatpush1.msra.mxu0 0.0
    %298 = vmatprep.subr.mxu0 0.0
    %299 = vmatpush1.msra.mxu0 0.0
    %300 = vmatprep.mubr.f32.mxu0 0.0
    %301 = vmatmul.mubr.f32.gmra.mrb[0].mxu0 %v222
    %v302 = vpop.f32.mrb[0].mxu0
    %v303 = vadd.f32 0.0, %v302
    %v304 = vpop.f32.mrb[0].mxu0
    %305 = vmatprep.mubr.f32.mxu0 0.0
    %306 = vmatmul.mubr.f32.gmra.mrb[0].mxu0 %v225
    %v307 = vpop.f32.mrb[0].mxu0
    %v308 = vadd.f32 0.0, %v307
    %v309 = vpop.f32.mrb[0].mxu0
    %310 = vmatprep.mubr.f32.mxu0 0.0
    %311 = vmatmul.mubr.f32.gmra.mrb[0].mxu0 %v228
    %v312 = vpop.f32.mrb[0].mxu0
    %v313 = vadd.f32 0.0, %v312
    %v314 = vpop.f32.mrb[0].mxu0
    %315 = vmatprep.mubr.f32.mxu0 0.0
    %316 = vmatmul.mubr.f32.gmra.mrb[0].mxu0 %v231
    %v317 = vpop.f32.mrb[0].mxu0
    %v318 = vadd.f32 0.0, %v317
    %v319 = vpop.f32.mrb[0].mxu0
    %320 = vmatprep.mubr.f32.mxu0 0.0
    %321 = vmatmul.mubr.f32.gmra.mrb[0].mxu0 %v234
    %v322 = vpop.f32.mrb[0].mxu0
    %v323 = vadd.f32 0.0, %v322
    %v324 = vpop.f32.mrb[0].mxu0
    %325 = vdwg.mxu0
    %vm326 = vcmask 326656
    %v328 = vsel %vm326, %v192, 0
    %v331 = vsel %vm326, %v193, 0
    %v334 = vsel %vm326, %v194, 0
    %v337 = vsel %vm326, %v195, 0
    %v340 = vsel %vm326, %v196, 0
    %v343 = vsel %vm326, %v197, 0
    %345 = vmatprep.subr.mxu0 0.0
    %346 = vmatpush1.msra.mxu0 %v303
    %347 = vmatprep.subr.mxu0 0.0
    %348 = vmatpush1.msra.mxu0 %v308
    %349 = vmatprep.subr.mxu0 0.0
    %350 = vmatpush1.msra.mxu0 %v313
    %351 = vmatprep.subr.mxu0 0.0
    %352 = vmatpush1.msra.mxu0 %v318
    %353 = vmatprep.subr.mxu0 0.0
    %354 = vmatpush1.msra.mxu0 %v323
    %355 = vmatprep.subr.mxu0 0.0
    %356 = vmatpush1.msra.mxu0 0.0
    %357 = vmatprep.subr.mxu0 0.0
    %358 = vmatpush1.msra.mxu0 0.0
    %359 = vmatprep.subr.mxu0 0.0
    %360 = vmatpush1.msra.mxu0 0.0
    %361 = vmatprep.subr.mxu0 0.0
    %362 = vmatpush1.msra.mxu0 0.0
    %363 = vmatprep.subr.mxu0 0.0
    %364 = vmatpush1.msra.mxu0 0.0
    %365 = vmatprep.subr.mxu0 0.0
    %366 = vmatpush1.msra.mxu0 0.0
    %367 = vmatprep.subr.mxu0 0.0
    %368 = vmatpush1.msra.mxu0 0.0
    %369 = vmatprep.subr.mxu0 0.0
    %370 = vmatpush1.msra.mxu0 0.0
    %371 = vmatprep.subr.mxu0 0.0
    %372 = vmatpush1.msra.mxu0 0.0
    %373 = vmatprep.subr.mxu0 0.0
    %374 = vmatpush1.msra.mxu0 0.0
    %375 = vmatprep.subr.mxu0 0.0
    %376 = vmatpush1.msra.mxu0 0.0
    %377 = vmatprep.subr.mxu0 0.0
    %378 = vmatpush1.msra.mxu0 0.0
    %379 = vmatprep.subr.mxu0 0.0
    %380 = vmatpush1.msra.mxu0 0.0
    %381 = vmatprep.subr.mxu0 0.0
    %382 = vmatpush1.msra.mxu0 0.0
    %383 = vmatprep.subr.mxu0 0.0
    %384 = vmatpush1.msra.mxu0 0.0
    %385 = vmatprep.subr.mxu0 0.0
    %386 = vmatpush1.msra.mxu0 0.0
    %387 = vmatprep.subr.mxu0 0.0
    %388 = vmatpush1.msra.mxu0 0.0
    %389 = vmatprep.subr.mxu0 0.0
    %390 = vmatpush1.msra.mxu0 0.0
    %391 = vmatprep.subr.mxu0 0.0
    %392 = vmatpush1.msra.mxu0 0.0
    %393 = vmatprep.subr.mxu0 0.0
    %394 = vmatpush1.msra.mxu0 0.0
    %395 = vmatprep.subr.mxu0 0.0
    %396 = vmatpush1.msra.mxu0 0.0
    %397 = vmatprep.subr.mxu0 0.0
    %398 = vmatpush1.msra.mxu0 0.0
    %399 = vmatprep.subr.mxu0 0.0
    %400 = vmatpush1.msra.mxu0 0.0
    %401 = vmatprep.subr.mxu0 0.0
    %402 = vmatpush1.msra.mxu0 0.0
    %403 = vmatprep.subr.mxu0 0.0
    %404 = vmatpush1.msra.mxu0 0.0
    %405 = vmatprep.subr.mxu0 0.0
    %406 = vmatpush1.msra.mxu0 0.0
    %407 = vmatprep.subr.mxu0 0.0
    %408 = vmatpush1.msra.mxu0 0.0
    %409 = vmatprep.mubr.f32.mxu0 0.0
    %410 = vmatmul.mubr.f32.gmra.mrb[0].mxu0 %v328
    %v411 = vpop.f32.mrb[0].mxu0
    %v412 = vadd.f32 0.0, %v411
    %v413 = vpop.f32.mrb[0].mxu0
    %414 = vmatprep.mubr.f32.mxu0 0.0
    %415 = vmatmul.mubr.f32.gmra.mrb[0].mxu0 %v331
    %v416 = vpop.f32.mrb[0].mxu0
    %v417 = vadd.f32 0.0, %v416
    %v418 = vpop.f32.mrb[0].mxu0
    %419 = vmatprep.mubr.f32.mxu0 0.0
    %420 = vmatmul.mubr.f32.gmra.mrb[0].mxu0 %v334
    %v421 = vpop.f32.mrb[0].mxu0
    %v422 = vadd.f32 0.0, %v421
    %v423 = vpop.f32.mrb[0].mxu0
    %424 = vmatprep.mubr.f32.mxu0 0.0
    %425 = vmatmul.mubr.f32.gmra.mrb[0].mxu0 %v337
    %v426 = vpop.f32.mrb[0].mxu0
    %v427 = vadd.f32 0.0, %v426
    %v428 = vpop.f32.mrb[0].mxu0
    %429 = vmatprep.mubr.f32.mxu0 0.0
    %430 = vmatmul.mubr.f32.gmra.mrb[0].mxu0 %v340
    %v431 = vpop.f32.mrb[0].mxu0
    %v432 = vadd.f32 0.0, %v431
    %v433 = vpop.f32.mrb[0].mxu0
    %434 = vmatprep.mubr.f32.mxu0 0.0
    %435 = vmatmul.mubr.f32.gmra.mrb[0].mxu0 %v343
    %v436 = vpop.f32.mrb[0].mxu0
    %v437 = vadd.f32 0.0, %v436
    %v438 = vpop.f32.mrb[0].mxu0
    %439 = vdwg.mxu0
    %441 = vset.pattern.permute.xlu0 0
    %442 = vperm.xlu0 %441, %v412
    %v443 = vpop.permute.xlu0 %442
    %446 = vset.pattern.permute.xlu0 0
    %447 = vperm.xlu0 %446, %v417
    %v448 = vpop.permute.xlu0 %447
    %451 = vset.pattern.permute.xlu0 0
    %452 = vperm.xlu0 %451, %v422
    %v453 = vpop.permute.xlu0 %452
    %456 = vset.pattern.permute.xlu0 0
    %457 = vperm.xlu0 %456, %v427
    %v458 = vpop.permute.xlu0 %457
    %461 = vset.pattern.permute.xlu0 0
    %462 = vperm.xlu0 %461, %v432
    %v463 = vpop.permute.xlu0 %462
    %466 = vset.pattern.permute.xlu0 0
    %467 = vperm.xlu0 %466, %v437
    %v468 = vpop.permute.xlu0 %467
    %v470 = vsel %vm96, %v443, -1e+30
    %v471 = vsel %vm97, %v448, -1e+30
    %v472 = vsel %vm98, %v453, -1e+30
    %v473 = vsel %vm99, %v458, -1e+30
    %v474 = vsel %vm100, %v463, -1e+30
    %v475 = vsel %vm101, %v468, -1e+30
    %vm476 = vcmask 130048
    %v477 = vsel %vm476, %v470, -inf
    %v478 = vsel %vm476, %v471, -inf
    %v479 = vsel %vm476, %v472, -inf
    %v480 = vsel %vm476, %v473, -inf
    %v481 = vsel %vm476, %v474, -inf
    %v482 = vmax.f32 %v477, %v481
    %v483 = vsel %vm476, %v475, -inf
    %v484 = vmax.f32 %v478, %v483
    %v485 = vmax.f32 %v482, %v484
    %v486 = vmax.f32 %v479, %v480
    %v487 = vmax.f32 %v485, %v486
    %v488 = vrot.slane %v487, 4
    %v489 = vmax.f32 %v487, %v488
    %v490 = vrot.slane %v489, 2
    %v491 = vmax.f32 %v489, %v490
    %v492 = vrot.slane %v491, 1
    %v493 = vmax.f32 %v491, %v492
    %v494 = vmul.f32 %v108, %v493
    %v495 = vmul.f32 %v109, %v493
    %v496 = vmul.f32 %v110, %v493
    %v497 = vmul.f32 %v111, %v493
    %v498 = vmul.f32 %v112, %v493
    %v499 = vmul.f32 %v113, %v493
    %v500 = vsel %vm476, %v494, 0.0
    %501 = vadd.xlane.f32.xlu0 %v500
    %v502 = vpop.xlane.xlu0 %501
    %v503 = vsel %vm476, %v495, 0.0
    %504 = vadd.xlane.f32.xlu0 %v503
    %v505 = vpop.xlane.xlu0 %504
    %v506 = vsel %vm476, %v496, 0.0
    %507 = vadd.xlane.f32.xlu0 %v506
    %v508 = vpop.xlane.xlu0 %507
    %v509 = vsel %vm476, %v497, 0.0
    %510 = vadd.xlane.f32.xlu0 %v509
    %v511 = vpop.xlane.xlu0 %510
    %v512 = vsel %vm476, %v498, 0.0
    %513 = vadd.xlane.f32.xlu0 %v512
    %v514 = vpop.xlane.xlu0 %513
    %v515 = vsel %vm476, %v499, 0.0
    %516 = vadd.xlane.f32.xlu0 %v515
    %v517 = vpop.xlane.xlu0 %516
    %v518 = vsub.f32 %v412, %v502
    %v519 = vsub.f32 %v417, %v505
    %v520 = vsub.f32 %v422, %v508
    %v521 = vsub.f32 %v427, %v511
    %v522 = vsub.f32 %v432, %v514
    %v523 = vsub.f32 %v437, %v517
    %v524 = vmul.f32 %v518, 1.442695
    %v525 = vpow.pop %v524
    %v526 = vmul.f32 %v519, 1.442695
    %v527 = vpow.pop %v526
    %v528 = vmul.f32 %v520, 1.442695
    %v529 = vpow.pop %v528
    %v530 = vmul.f32 %v521, 1.442695
    %v531 = vpow.pop %v530
    %v532 = vmul.f32 %v522, 1.442695
    %v533 = vpow.pop %v532
    %v534 = vmul.f32 %v523, 1.442695
    %v535 = vpow.pop %v534
    %536 = vmatprep.subr.mxu0 0.0
    %537 = vmatpush1.msra.mxu0 %v49
    %538 = vmatprep.subr.mxu0 0.0
    %539 = vmatpush1.msra.mxu0 %v50
    %540 = vmatprep.subr.mxu0 0.0
    %541 = vmatpush1.msra.mxu0 %v51
    %542 = vmatprep.subr.mxu0 0.0
    %543 = vmatpush1.msra.mxu0 %v52
    %544 = vmatprep.subr.mxu0 0.0
    %545 = vmatpush1.msra.mxu0 %v53
    %546 = vmatprep.subr.mxu0 0.0
    %547 = vmatpush1.msra.mxu0 0.0
    %548 = vmatprep.subr.mxu0 0.0
    %549 = vmatpush1.msra.mxu0 0.0
    %550 = vmatprep.subr.mxu0 0.0
    %551 = vmatpush1.msra.mxu0 0.0
    %552 = vmatprep.subr.mxu0 0.0
    %553 = vmatpush1.msra.mxu0 0.0
    %554 = vmatprep.subr.mxu0 0.0
    %555 = vmatpush1.msra.mxu0 0.0
    %556 = vmatprep.subr.mxu0 0.0
    %557 = vmatpush1.msra.mxu0 0.0
    %558 = vmatprep.subr.mxu0 0.0
    %559 = vmatpush1.msra.mxu0 0.0
    %560 = vmatprep.subr.mxu0 0.0
    %561 = vmatpush1.msra.mxu0 0.0
    %562 = vmatprep.subr.mxu0 0.0
    %563 = vmatpush1.msra.mxu0 0.0
    %564 = vmatprep.subr.mxu0 0.0
    %565 = vmatpush1.msra.mxu0 0.0
    %566 = vmatprep.subr.mxu0 0.0
    %567 = vmatpush1.msra.mxu0 0.0
    %568 = vmatprep.subr.mxu0 0.0
    %569 = vmatpush1.msra.mxu0 0.0
    %570 = vmatprep.subr.mxu0 0.0
    %571 = vmatpush1.msra.mxu0 0.0
    %572 = vmatprep.subr.mxu0 0.0
    %573 = vmatpush1.msra.mxu0 0.0
    %574 = vmatprep.subr.mxu0 0.0
    %575 = vmatpush1.msra.mxu0 0.0
    %576 = vmatprep.subr.mxu0 0.0
    %577 = vmatpush1.msra.mxu0 0.0
    %578 = vmatprep.subr.mxu0 0.0
    %579 = vmatpush1.msra.mxu0 0.0
    %580 = vmatprep.subr.mxu0 0.0
    %581 = vmatpush1.msra.mxu0 0.0
    %582 = vmatprep.subr.mxu0 0.0
    %583 = vmatpush1.msra.mxu0 0.0
    %584 = vmatprep.subr.mxu0 0.0
    %585 = vmatpush1.msra.mxu0 0.0
    %586 = vmatprep.subr.mxu0 0.0
    %587 = vmatpush1.msra.mxu0 0.0
    %588 = vmatprep.subr.mxu0 0.0
    %589 = vmatpush1.msra.mxu0 0.0
    %590 = vmatprep.subr.mxu0 0.0
    %591 = vmatpush1.msra.mxu0 0.0
    %592 = vmatprep.subr.mxu0 0.0
    %593 = vmatpush1.msra.mxu0 0.0
    %594 = vmatprep.subr.mxu0 0.0
    %595 = vmatpush1.msra.mxu0 0.0
    %596 = vmatprep.subr.mxu0 0.0
    %597 = vmatpush1.msra.mxu0 0.0
    %598 = vmatprep.subr.mxu0 0.0
    %599 = vmatpush1.msra.mxu0 0.0
    %600 = vmatprep.mubr.f32.mxu0 0.0
    %601 = vmatmul.mubr.f32.gmra.mrb[0].mxu0 %v328
    %v602 = vpop.f32.mrb[0].mxu0
    %v603 = vadd.f32 0.0, %v602
    %v604 = vpop.f32.mrb[0].mxu0
    %605 = vmatprep.mubr.f32.mxu0 0.0
    %606 = vmatmul.mubr.f32.gmra.mrb[0].mxu0 %v331
    %v607 = vpop.f32.mrb[0].mxu0
    %v608 = vadd.f32 0.0, %v607
    %v609 = vpop.f32.mrb[0].mxu0
    %610 = vmatprep.mubr.f32.mxu0 0.0
    %611 = vmatmul.mubr.f32.gmra.mrb[0].mxu0 %v334
    %v612 = vpop.f32.mrb[0].mxu0
    %v613 = vadd.f32 0.0, %v612
    %v614 = vpop.f32.mrb[0].mxu0
    %615 = vmatprep.mubr.f32.mxu0 0.0
    %616 = vmatmul.mubr.f32.gmra.mrb[0].mxu0 %v337
    %v617 = vpop.f32.mrb[0].mxu0
    %v618 = vadd.f32 0.0, %v617
    %v619 = vpop.f32.mrb[0].mxu0
    %620 = vmatprep.mubr.f32.mxu0 0.0
    %621 = vmatmul.mubr.f32.gmra.mrb[0].mxu0 %v340
    %v622 = vpop.f32.mrb[0].mxu0
    %v623 = vadd.f32 0.0, %v622
    %v624 = vpop.f32.mrb[0].mxu0
    %625 = vmatprep.mubr.f32.mxu0 0.0
    %626 = vmatmul.mubr.f32.gmra.mrb[0].mxu0 %v343
    %v627 = vpop.f32.mrb[0].mxu0
    %v628 = vadd.f32 0.0, %v627
    %v629 = vpop.f32.mrb[0].mxu0
    %630 = vdwg.mxu0
    %632 = vset.pattern.permute.xlu0 0
    %633 = vperm.xlu0 %632, %v525
    %v634 = vpop.permute.xlu0 %633
    %637 = vset.pattern.permute.xlu0 0
    %638 = vperm.xlu0 %637, %v527
    %v639 = vpop.permute.xlu0 %638
    %642 = vset.pattern.permute.xlu0 0
    %643 = vperm.xlu0 %642, %v529
    %v644 = vpop.permute.xlu0 %643
    %647 = vset.pattern.permute.xlu0 0
    %648 = vperm.xlu0 %647, %v531
    %v649 = vpop.permute.xlu0 %648
    %652 = vset.pattern.permute.xlu0 0
    %653 = vperm.xlu0 %652, %v533
    %v654 = vpop.permute.xlu0 %653
    %657 = vset.pattern.permute.xlu0 0
    %658 = vperm.xlu0 %657, %v535
    %v659 = vpop.permute.xlu0 %658
    %v661 = vmul.f32 %v634, %v603
    %v662 = vmul.f32 %v639, %v608
    %v663 = vmul.f32 %v644, %v613
    %v664 = vmul.f32 %v649, %v618
    %v665 = vmul.f32 %v654, %v623
    %v666 = vmul.f32 %v659, %v628
    %vm667 = vcmask 392192
    %v669 = vsel %vm667, %v206, 0
    %v672 = vsel %vm667, %v207, 0
    %674 = vmatprep.subr.mxu0 0.0
    %675 = vmatpush1.msra.mxu0 %v661
    %676 = vmatprep.subr.mxu0 0.0
    %677 = vmatpush1.msra.mxu0 %v662
    %678 = vmatprep.subr.mxu0 0.0
    %679 = vmatpush1.msra.mxu0 %v663
    %680 = vmatprep.subr.mxu0 0.0
    %681 = vmatpush1.msra.mxu0 %v664
    %682 = vmatprep.subr.mxu0 0.0
    %683 = vmatpush1.msra.mxu0 %v665
    %684 = vmatprep.subr.mxu0 0.0
    %685 = vmatpush1.msra.mxu0 %v666
    %686 = vmatprep.subr.mxu0 0.0
    %687 = vmatpush1.msra.mxu0 0.0
    %688 = vmatprep.subr.mxu0 0.0
    %689 = vmatpush1.msra.mxu0 0.0
    %690 = vmatprep.subr.mxu0 0.0
    %691 = vmatpush1.msra.mxu0 0.0
    %692 = vmatprep.subr.mxu0 0.0
    %693 = vmatpush1.msra.mxu0 0.0
    %694 = vmatprep.subr.mxu0 0.0
    %695 = vmatpush1.msra.mxu0 0.0
    %696 = vmatprep.subr.mxu0 0.0
    %697 = vmatpush1.msra.mxu0 0.0
    %698 = vmatprep.subr.mxu0 0.0
    %699 = vmatpush1.msra.mxu0 0.0
    %700 = vmatprep.subr.mxu0 0.0
    %701 = vmatpush1.msra.mxu0 0.0
    %702 = vmatprep.subr.mxu0 0.0
    %703 = vmatpush1.msra.mxu0 0.0
    %704 = vmatprep.subr.mxu0 0.0
    %705 = vmatpush1.msra.mxu0 0.0
    %706 = vmatprep.subr.mxu0 0.0
    %707 = vmatpush1.msra.mxu0 0.0
    %708 = vmatprep.subr.mxu0 0.0
    %709 = vmatpush1.msra.mxu0 0.0
    %710 = vmatprep.subr.mxu0 0.0
    %711 = vmatpush1.msra.mxu0 0.0
    %712 = vmatprep.subr.mxu0 0.0
    %713 = vmatpush1.msra.mxu0 0.0
    %714 = vmatprep.subr.mxu0 0.0
    %715 = vmatpush1.msra.mxu0 0.0
    %716 = vmatprep.subr.mxu0 0.0
    %717 = vmatpush1.msra.mxu0 0.0
    %718 = vmatprep.subr.mxu0 0.0
    %719 = vmatpush1.msra.mxu0 0.0
    %720 = vmatprep.subr.mxu0 0.0
    %721 = vmatpush1.msra.mxu0 0.0
    %722 = vmatprep.subr.mxu0 0.0
    %723 = vmatpush1.msra.mxu0 0.0
    %724 = vmatprep.subr.mxu0 0.0
    %725 = vmatpush1.msra.mxu0 0.0
    %726 = vmatprep.subr.mxu0 0.0
    %727 = vmatpush1.msra.mxu0 0.0
    %728 = vmatprep.subr.mxu0 0.0
    %729 = vmatpush1.msra.mxu0 0.0
    %730 = vmatprep.subr.mxu0 0.0
    %731 = vmatpush1.msra.mxu0 0.0
    %732 = vmatprep.subr.mxu0 0.0
    %733 = vmatpush1.msra.mxu0 0.0
    %734 = vmatprep.subr.mxu0 0.0
    %735 = vmatpush1.msra.mxu0 0.0
    %736 = vmatprep.subr.mxu0 0.0
    %737 = vmatpush1.msra.mxu0 0.0
    %738 = vmatprep.mubr.f32.mxu0 0.0
    %739 = vmatmul.mubr.f32.gmra.mrb[0].mxu0 %v669
    %v740 = vpop.f32.mrb[0].mxu0
    %v741 = vadd.f32 0.0, %v740
    %v742 = vpop.f32.mrb[0].mxu0
    %743 = vmatprep.mubr.f32.mxu0 0.0
    %744 = vmatmul.mubr.f32.gmra.mrb[0].mxu0 %v672
    %v745 = vpop.f32.mrb[0].mxu0
    %v746 = vadd.f32 0.0, %v745
    %v747 = vpop.f32.mrb[0].mxu0
    %748 = vdwg.mxu0
    %749 = vmatprep.subr.mxu0 0.0
    %750 = vmatpush1.msra.mxu0 %v525
    %751 = vmatprep.subr.mxu0 0.0
    %752 = vmatpush1.msra.mxu0 %v527
    %753 = vmatprep.subr.mxu0 0.0
    %754 = vmatpush1.msra.mxu0 %v529
    %755 = vmatprep.subr.mxu0 0.0
    %756 = vmatpush1.msra.mxu0 %v531
    %757 = vmatprep.subr.mxu0 0.0
    %758 = vmatpush1.msra.mxu0 %v533
    %759 = vmatprep.subr.mxu0 0.0
    %760 = vmatpush1.msra.mxu0 %v535
    %761 = vmatprep.subr.mxu0 0.0
    %762 = vmatpush1.msra.mxu0 0.0
    %763 = vmatprep.subr.mxu0 0.0
    %764 = vmatpush1.msra.mxu0 0.0
    %765 = vmatprep.subr.mxu0 0.0
    %766 = vmatpush1.msra.mxu0 0.0
    %767 = vmatprep.subr.mxu0 0.0
    %768 = vmatpush1.msra.mxu0 0.0
    %769 = vmatprep.subr.mxu0 0.0
    %770 = vmatpush1.msra.mxu0 0.0
    %771 = vmatprep.subr.mxu0 0.0
    %772 = vmatpush1.msra.mxu0 0.0
    %773 = vmatprep.subr.mxu0 0.0
    %774 = vmatpush1.msra.mxu0 0.0
    %775 = vmatprep.subr.mxu0 0.0
    %776 = vmatpush1.msra.mxu0 0.0
    %777 = vmatprep.subr.mxu0 0.0
    %778 = vmatpush1.msra.mxu0 0.0
    %779 = vmatprep.subr.mxu0 0.0
    %780 = vmatpush1.msra.mxu0 0.0
    %781 = vmatprep.subr.mxu0 0.0
    %782 = vmatpush1.msra.mxu0 0.0
    %783 = vmatprep.subr.mxu0 0.0
    %784 = vmatpush1.msra.mxu0 0.0
    %785 = vmatprep.subr.mxu0 0.0
    %786 = vmatpush1.msra.mxu0 0.0
    %787 = vmatprep.subr.mxu0 0.0
    %788 = vmatpush1.msra.mxu0 0.0
    %789 = vmatprep.subr.mxu0 0.0
    %790 = vmatpush1.msra.mxu0 0.0
    %791 = vmatprep.subr.mxu0 0.0
    %792 = vmatpush1.msra.mxu0 0.0
    %793 = vmatprep.subr.mxu0 0.0
    %794 = vmatpush1.msra.mxu0 0.0
    %795 = vmatprep.subr.mxu0 0.0
    %796 = vmatpush1.msra.mxu0 0.0
    %797 = vmatprep.subr.mxu0 0.0
    %798 = vmatpush1.msra.mxu0 0.0
    %799 = vmatprep.subr.mxu0 0.0
    %800 = vmatpush1.msra.mxu0 0.0
    %801 = vmatprep.subr.mxu0 0.0
    %802 = vmatpush1.msra.mxu0 0.0
    %803 = vmatprep.subr.mxu0 0.0
    %804 = vmatpush1.msra.mxu0 0.0
    %805 = vmatprep.subr.mxu0 0.0
    %806 = vmatpush1.msra.mxu0 0.0
    %807 = vmatprep.subr.mxu0 0.0
    %808 = vmatpush1.msra.mxu0 0.0
    %809 = vmatprep.subr.mxu0 0.0
    %810 = vmatpush1.msra.mxu0 0.0
    %811 = vmatprep.subr.mxu0 0.0
    %812 = vmatpush1.msra.mxu0 0.0
    %813 = vmatprep.mubr.f32.mxu0 0.0
    %814 = vmatmul.mubr.f32.gmra.mrb[0].mxu0 %v669
    %v815 = vpop.f32.mrb[0].mxu0
    %v816 = vadd.f32 1e-16, %v815
    %v817 = vpop.f32.mrb[0].mxu0
    %818 = vmatprep.mubr.f32.mxu0 0.0
    %819 = vmatmul.mubr.f32.gmra.mrb[0].mxu0 %v672
    %v820 = vpop.f32.mrb[0].mxu0
    %v821 = vadd.f32 1e-16, %v820
    %v822 = vpop.f32.mrb[0].mxu0
    %823 = vdwg.mxu0
    %825 = vset.pattern.permute.xlu0 0
    %826 = vperm.xlu0 %825, %v816
    %v827 = vpop.permute.xlu0 %826
    %830 = vset.pattern.permute.xlu0 0
    %831 = vperm.xlu0 %830, %v821
    %v832 = vpop.permute.xlu0 %831
    %v834 = vrcp.pop %v827
    %v835 = vmul.f32 %v741, %v834
    %v836 = vrcp.pop %v832
    %v837 = vmul.f32 %v746, %v836
    %v838 = vmax.f32 %v835, 0.0
    %v839 = vmax.f32 %v837, 0.0
    %842 = vrot.lane.b32.xlu0 %v838, 32
    %v843 = vpop.permute.xlu0 %842
    %844 = vrot.lane.b32.xlu0 %v839, 32
    %v845 = vpop.permute.xlu0 %844
    %vm848 = vcmask 261120
    %v849 = vsel %vm848, %v47, %v843
    %v850 = vsel %vm848, %v48, %v845
    %v851 = vld [vmem:[#allocation2] sm:$0xff]
    %v852 = vld [vmem:[#allocation2 + $0x8] sm:$0xff]
    %v853 = vld [vmem:[#allocation2 + $0x10] sm:$0xff]
    %v854 = vld [vmem:[#allocation2 + $0x18] sm:$0xff]
    %v855 = vld [vmem:[#allocation2 + $0x20] sm:$0xff]
    %v856 = vld [vmem:[#allocation2 + $0x28] sm:$0xff]
    %v857 = vld [vmem:[#allocation2 + $0x30] sm:$0xff]
    %v858 = vld [vmem:[#allocation2 + $0x38] sm:$0xff]
    %v859 = vld [vmem:[#allocation2 + $0x40] sm:$0xff]
    %v860 = vld [vmem:[#allocation2 + $0x48] sm:$0xff]
    %v861 = vld [vmem:[#allocation2 + $0x50] sm:$0xff]
    %v862 = vld [vmem:[#allocation2 + $0x58] sm:$0xff]
    %v863 = vld [vmem:[#allocation2 + $0x60] sm:$0xff]
    %v864 = vld [vmem:[#allocation2 + $0x68] sm:$0xff]
    %v865 = vld [vmem:[#allocation2 + $0x70] sm:$0xff]
    %v866 = vld [vmem:[#allocation2 + $0x78] sm:$0xff]
    %v867 = vld [vmem:[#allocation2 + $0x80] sm:$0xff]
    %v868 = vld [vmem:[#allocation2 + $0x88] sm:$0xff]
    %v869 = vld [vmem:[#allocation2 + $0x90] sm:$0xff]
    %v870 = vld [vmem:[#allocation2 + $0x98] sm:$0xff]
    %v871 = vld [vmem:[#allocation2 + $0xa0] sm:$0xff]
    %v872 = vld [vmem:[#allocation2 + $0xa8] sm:$0xff]
    %v873 = vld [vmem:[#allocation2 + $0xb0] sm:$0xff]
    %v874 = vld [vmem:[#allocation2 + $0xb8] sm:$0xff]
    %v875 = vld [vmem:[#allocation2 + $0xc0] sm:$0xff]
    %v876 = vld [vmem:[#allocation2 + $0xc8] sm:$0xff]
    %v877 = vld [vmem:[#allocation2 + $0xd0] sm:$0xff]
    %v878 = vld [vmem:[#allocation2 + $0xd8] sm:$0xff]
    %v879 = vld [vmem:[#allocation2 + $0xe0] sm:$0xff]
    %v880 = vld [vmem:[#allocation2 + $0xe8] sm:$0xff]
    %v881 = vld [vmem:[#allocation2 + $0xf0] sm:$0xff]
    %v882 = vld [vmem:[#allocation2 + $0xf8] sm:$0xff]
    %v883 = vld [vmem:[#allocation2 + $0x100] sm:$0xff]
    %v884 = vld [vmem:[#allocation2 + $0x108] sm:$0xff]
    %v885 = vld [vmem:[#allocation2 + $0x110] sm:$0xff]
    %v886 = vld [vmem:[#allocation2 + $0x118] sm:$0xff]
    %v887 = vld [vmem:[#allocation2 + $0x120] sm:$0xff]
    %v888 = vld [vmem:[#allocation2 + $0x128] sm:$0xff]
    %v889 = vld [vmem:[#allocation2 + $0x130] sm:$0xff]
    %v890 = vld [vmem:[#allocation2 + $0x138] sm:$0xff]
    %v891 = vld [vmem:[#allocation2 + $0x140] sm:$0xff]
    %v892 = vld [vmem:[#allocation2 + $0x148] sm:$0xff]
    %v893 = vld [vmem:[#allocation2 + $0x150] sm:$0xff]
    %v894 = vld [vmem:[#allocation2 + $0x158] sm:$0xff]
    %v895 = vld [vmem:[#allocation2 + $0x160] sm:$0xff]
    %v896 = vld [vmem:[#allocation2 + $0x168] sm:$0xff]
    %v897 = vld [vmem:[#allocation2 + $0x170] sm:$0xff]
    %v898 = vld [vmem:[#allocation2 + $0x178] sm:$0xff]
    %v899 = vld [vmem:[%s8] sm:$0x7]
    %v901 = vlaneseq
    %v902 = vshrl.u32 %v901, 7
    %v903 = vsub.s32 0, %v902
    %v904 = vrot.slane %v899, %v903
    %v905 = vlaneseq
    %v906 = vshrl.u32 %v905, 7
    %v907 = vsub.s32 1, %v906
    %v908 = vrot.slane %v899, %v907
    %v909 = vlaneseq
    %v910 = vshrl.u32 %v909, 7
    %v911 = vsub.s32 2, %v910
    %v912 = vrot.slane %v899, %v911
    %916 = vmatprep.subr.mxu0 %v852
    %917 = vmatpush1.msra.mxu0 %v851
    %918 = vmatprep.subr.mxu0 %v855
    %919 = vmatpush1.msra.mxu0 %v854
    %920 = vmatprep.subr.mxu0 %v858
    %921 = vmatpush1.msra.mxu0 %v857
    %922 = vmatprep.subr.mxu0 %v861
    %923 = vmatpush1.msra.mxu0 %v860
    %924 = vmatprep.subr.mxu0 %v864
    %925 = vmatpush1.msra.mxu0 %v863
    %926 = vmatprep.subr.mxu0 %v867
    %927 = vmatpush1.msra.mxu0 %v866
    %928 = vmatprep.subr.mxu0 %v870
    %929 = vmatpush1.msra.mxu0 %v869
    %930 = vmatprep.subr.mxu0 %v873
    %931 = vmatpush1.msra.mxu0 %v872
    %932 = vmatprep.subr.mxu0 %v876
    %933 = vmatpush1.msra.mxu0 %v875
    %934 = vmatprep.subr.mxu0 %v879
    %935 = vmatpush1.msra.mxu0 %v878
    %936 = vmatprep.subr.mxu0 %v882
    %937 = vmatpush1.msra.mxu0 %v881
    %938 = vmatprep.subr.mxu0 %v885
    %939 = vmatpush1.msra.mxu0 %v884
    %940 = vmatprep.subr.mxu0 %v888
    %941 = vmatpush1.msra.mxu0 %v887
    %942 = vmatprep.subr.mxu0 %v891
    %943 = vmatpush1.msra.mxu0 %v890
    %944 = vmatprep.subr.mxu0 %v894
    %945 = vmatpush1.msra.mxu0 %v893
    %946 = vmatprep.subr.mxu0 %v897
    %947 = vmatpush1.msra.mxu0 %v896
    %948 = vmatprep.subr.mxu0 0.0
    %949 = vmatpush1.msra.mxu0 0.0
    %950 = vmatprep.subr.mxu0 0.0
    %951 = vmatpush1.msra.mxu0 0.0
    %952 = vmatprep.subr.mxu0 0.0
    %953 = vmatpush1.msra.mxu0 0.0
    %954 = vmatprep.subr.mxu0 0.0
    %955 = vmatpush1.msra.mxu0 0.0
    %956 = vmatprep.subr.mxu0 0.0
    %957 = vmatpush1.msra.mxu0 0.0
    %958 = vmatprep.subr.mxu0 0.0
    %959 = vmatpush1.msra.mxu0 0.0
    %960 = vmatprep.subr.mxu0 0.0
    %961 = vmatpush1.msra.mxu0 0.0
    %962 = vmatprep.subr.mxu0 0.0
    %963 = vmatpush1.msra.mxu0 0.0
    %964 = vmatprep.subr.mxu0 0.0
    %965 = vmatpush1.msra.mxu0 0.0
    %966 = vmatprep.subr.mxu0 0.0
    %967 = vmatpush1.msra.mxu0 0.0
    %968 = vmatprep.subr.mxu0 0.0
    %969 = vmatpush1.msra.mxu0 0.0
    %970 = vmatprep.subr.mxu0 0.0
    %971 = vmatpush1.msra.mxu0 0.0
    %972 = vmatprep.subr.mxu0 0.0
    %973 = vmatpush1.msra.mxu0 0.0
    %974 = vmatprep.subr.mxu0 0.0
    %975 = vmatpush1.msra.mxu0 0.0
    %976 = vmatprep.subr.mxu0 0.0
    %977 = vmatpush1.msra.mxu0 0.0
    %978 = vmatprep.subr.mxu0 0.0
    %979 = vmatpush1.msra.mxu0 0.0
    %980 = vmatprep.mubr.f32.mxu0 0.0
    %981 = vmatmul.mubr.f32.gmra.mrb[0].mxu0 %v849
    %v982 = vpop.f32.mrb[0].mxu0
    %v983 = vadd.f32 %v904, %v982
    %v984 = vpop.f32.mrb[0].mxu0
    %v985 = vadd.f32 %v908, %v984
    %986 = vmatprep.mubr.f32.mxu0 0.0
    %987 = vmatmul.mubr.f32.gmra.mrb[0].mxu0 %v850
    %v988 = vpop.f32.mrb[0].mxu0
    %v989 = vadd.f32 %v904, %v988
    %v990 = vpop.f32.mrb[0].mxu0
    %v991 = vadd.f32 %v908, %v990
    %992 = vdwg.mxu0
    %993 = vmatprep.subr.mxu0 0.0
    %994 = vmatpush1.msra.mxu0 %v853
    %995 = vmatprep.subr.mxu0 0.0
    %996 = vmatpush1.msra.mxu0 %v856
    %997 = vmatprep.subr.mxu0 0.0
    %998 = vmatpush1.msra.mxu0 %v859
    %999 = vmatprep.subr.mxu0 0.0
    %1000 = vmatpush1.msra.mxu0 %v862
    %1001 = vmatprep.subr.mxu0 0.0
    %1002 = vmatpush1.msra.mxu0 %v865
    %1003 = vmatprep.subr.mxu0 0.0
    %1004 = vmatpush1.msra.mxu0 %v868
    %1005 = vmatprep.subr.mxu0 0.0
    %1006 = vmatpush1.msra.mxu0 %v871
    %1007 = vmatprep.subr.mxu0 0.0
    %1008 = vmatpush1.msra.mxu0 %v874
    %1009 = vmatprep.subr.mxu0 0.0
    %1010 = vmatpush1.msra.mxu0 %v877
    %1011 = vmatprep.subr.mxu0 0.0
    %1012 = vmatpush1.msra.mxu0 %v880
    %1013 = vmatprep.subr.mxu0 0.0
    %1014 = vmatpush1.msra.mxu0 %v883
    %1015 = vmatprep.subr.mxu0 0.0
    %1016 = vmatpush1.msra.mxu0 %v886
    %1017 = vmatprep.subr.mxu0 0.0
    %1018 = vmatpush1.msra.mxu0 %v889
    %1019 = vmatprep.subr.mxu0 0.0
    %1020 = vmatpush1.msra.mxu0 %v892
    %1021 = vmatprep.subr.mxu0 0.0
    %1022 = vmatpush1.msra.mxu0 %v895
    %1023 = vmatprep.subr.mxu0 0.0
    %1024 = vmatpush1.msra.mxu0 %v898
    %1025 = vmatprep.subr.mxu0 0.0
    %1026 = vmatpush1.msra.mxu0 0.0
    %1027 = vmatprep.subr.mxu0 0.0
    %1028 = vmatpush1.msra.mxu0 0.0
    %1029 = vmatprep.subr.mxu0 0.0
    %1030 = vmatpush1.msra.mxu0 0.0
    %1031 = vmatprep.subr.mxu0 0.0
    %1032 = vmatpush1.msra.mxu0 0.0
    %1033 = vmatprep.subr.mxu0 0.0
    %1034 = vmatpush1.msra.mxu0 0.0
    %1035 = vmatprep.subr.mxu0 0.0
    %1036 = vmatpush1.msra.mxu0 0.0
    %1037 = vmatprep.subr.mxu0 0.0
    %1038 = vmatpush1.msra.mxu0 0.0
    %1039 = vmatprep.subr.mxu0 0.0
    %1040 = vmatpush1.msra.mxu0 0.0
    %1041 = vmatprep.subr.mxu0 0.0
    %1042 = vmatpush1.msra.mxu0 0.0
    %1043 = vmatprep.subr.mxu0 0.0
    %1044 = vmatpush1.msra.mxu0 0.0
    %1045 = vmatprep.subr.mxu0 0.0
    %1046 = vmatpush1.msra.mxu0 0.0
    %1047 = vmatprep.subr.mxu0 0.0
    %1048 = vmatpush1.msra.mxu0 0.0
    %1049 = vmatprep.subr.mxu0 0.0
    %1050 = vmatpush1.msra.mxu0 0.0
    %1051 = vmatprep.subr.mxu0 0.0
    %1052 = vmatpush1.msra.mxu0 0.0
    %1053 = vmatprep.subr.mxu0 0.0
    %1054 = vmatpush1.msra.mxu0 0.0
    %1055 = vmatprep.subr.mxu0 0.0
    %1056 = vmatpush1.msra.mxu0 0.0
    %1057 = vmatprep.mubr.f32.mxu0 0.0
    %1058 = vmatmul.mubr.f32.gmra.mrb[0].mxu0 %v849
    %v1059 = vpop.f32.mrb[0].mxu0
    %v1060 = vadd.f32 %v912, %v1059
    %v1061 = vpop.f32.mrb[0].mxu0
    %1062 = vmatprep.mubr.f32.mxu0 0.0
    %1063 = vmatmul.mubr.f32.gmra.mrb[0].mxu0 %v850
    %v1064 = vpop.f32.mrb[0].mxu0
    %v1065 = vadd.f32 %v912, %v1064
    %v1066 = vpop.f32.mrb[0].mxu0
    %1067 = vdwg.mxu0
    %1068 = vst [vmem:[#allocation5] sm:$0xff] %v983
    %1069 = vst [vmem:[#allocation5 + $0x8] sm:$0xff] %v985
    %1070 = vst [vmem:[#allocation5 + $0x10] sm:$0xff] %v1060
    %1071 = vst [vmem:[#allocation5 + $0x18] sm:$0xff] %v989
    %1072 = vst [vmem:[#allocation5 + $0x20] sm:$0xff] %v991
    %1073 = vst [vmem:[#allocation5 + $0x28] sm:$0xff] %v1065
    // Predicated region
    $region42: #{tpu_custom_call.1} parent=1 // pred_check
      _
    $region43: #{tpu_custom_call.1} parent=1 // pred_check_branch
      %1075 = sbr.rel (0) target = $region45
    $region44: #{tpu_custom_call.1} parent=1 // pred_region
      %s1077 = ssub.s32 768, 768
      %1078 = vsyncadd [#allocation4], %s1077
      %s1079 = sshll.u32 [#allocation5], 4
      %s1080 = int_to_ptr.vmem [resolvable:$true] %s1079
      %1085 = dma.vmem_to_hbm [thread:$0]  %s1080, 768, %s9, [#allocation4], 384, 384, 24
    $region45: #{tpu_custom_call.1} parent=1 // pred_fallthru
      _
    // Predicated region
    $region46: #{tpu_custom_call.1} parent=1 // pred_check
      _
    $region47: #{tpu_custom_call.1} parent=1 // pred_check_branch
      %1087 = sbr.rel (0) target = $region49
    $region48: #{tpu_custom_call.1} parent=1 // pred_region
      %1088 = dma.done [#allocation4], 768
    $region49: #{tpu_custom_call.1} parent=1 // pred_fallthru
      _
    %1089 = vsyncpa [#allocation3], 1
    %1090 = vsyncpa [#allocation4], 1

</llo_original>
